<compile_context>
chip_gen: v7x
topology: tpu7x:2x2x1
jax: 0.10.0
libtpu: 0.0.40
codegen_flags: <defaults>
</compile_context>

<pallas_src>
import functools

import jax
import jax.numpy as jnp
from jax import lax
from jax.experimental import pallas as pl
from jax.experimental.pallas import tpu as pltpu

_LANE = 128
_BLOCK_BYTE_BUDGET = 4 * 1024 * 1024   # per-input block; 2 inputs x 2 buffers = 16 MiB live
_VMEM_LIMIT_BYTES = 32 * 1024 * 1024   # within scoped/physical VMEM on v5e/v6e/v7x


def _iou_stats_kernel(p_ref, g_ref, o_ref, inter_acc, p_acc, g_acc,
                      *, m_rows, need_mask):
    """Grid = (B, nsplit, K).

    p_ref, g_ref: (1, TM, L) tiles for batch b, split s, chunk k.
    o_ref:        (1, 1, 3, L) per-lane partial sums [p*g, p, g]; resident
                  across k, written once at the last chunk.
    *_acc:        (1, L) f32 VMEM scratch accumulators.
    """
    k = pl.program_id(2)
    nk = pl.num_programs(2)

    p = p_ref[0].astype(jnp.float32)          # (TM, L)
    g = g_ref[0].astype(jnp.float32)          # (TM, L)

    if need_mask:
        # Last block may overhang the row axis; zero out-of-range rows
        # (select, not multiply, so garbage NaNs cannot leak in).
        row0 = (pl.program_id(1) * nk + k) * p.shape[0]
        rows = lax.broadcasted_iota(jnp.int32, p.shape, 0) + row0
        valid = rows < m_rows
        p = jnp.where(valid, p, 0.0)
        g = jnp.where(valid, g, 0.0)

    inter = jnp.sum(p * g, axis=0, keepdims=True)   # (1, L)
    sp = jnp.sum(p, axis=0, keepdims=True)          # (1, L)
    sg = jnp.sum(g, axis=0, keepdims=True)          # (1, L)

    @pl.when(k == 0)
    def _():
        inter_acc[...] = inter
        p_acc[...] = sp
        g_acc[...] = sg

    @pl.when(k > 0)
    def _():
        inter_acc[...] += inter
        p_acc[...] += sp
        g_acc[...] += sg

    @pl.when(k == nk - 1)
    def _():
        o_ref[...] = jnp.concatenate(
            [inter_acc[...], p_acc[...], g_acc[...]], axis=0)[None, None]


def _choose_row_tile(m_rows, lane, itemsize):
    """Row-tile (sublane) size for (1, tm, lane) input blocks."""
    cap = max(8, (_BLOCK_BYTE_BUDGET // (lane * itemsize)) // 8 * 8)
    if cap >= m_rows:
        tm = m_rows
        # Even when everything fits in one block, keep a few chunks so the
        # DMA of chunk i+1 overlaps the reduce of chunk i.
        for n in (4, 2):
            if m_rows % (8 * n) == 0:
                tm = m_rows // n
                break
    else:
        tm = cap
    n_blocks = -(-m_rows // tm)
    return tm, n_blocks


def _per_batch_stats(p3, g3, *, tm, nsplit, k_chunks, m_rows, need_mask):
    """p3, g3: (B, M, L); returns (B, nsplit, 3, L) per-lane partial sums."""
    B, _, L = p3.shape
    kern = functools.partial(_iou_stats_kernel, m_rows=m_rows, need_mask=need_mask)

    in_bytes = p3.size * p3.dtype.itemsize + g3.size * g3.dtype.itemsize
    out_bytes = B * nsplit * 3 * L * 4
    cost = pl.CostEstimate(flops=4 * p3.size, transcendentals=0,
                           bytes_accessed=in_bytes + out_bytes)

    return pl.pallas_call(
        kern,
        out_shape=jax.ShapeDtypeStruct((B, nsplit, 3, L), jnp.float32),
        grid_spec=pltpu.PrefetchScalarGridSpec(
            num_scalar_prefetch=0,
            grid=(B, nsplit, k_chunks),
            in_specs=[
                pl.BlockSpec((1, tm, L), lambda b, s, k: (b, s * k_chunks + k, 0)),
                pl.BlockSpec((1, tm, L), lambda b, s, k: (b, s * k_chunks + k, 0)),
            ],
            out_specs=pl.BlockSpec((1, 1, 3, L), lambda b, s, k: (b, s, 0, 0)),
            scratch_shapes=[pltpu.VMEM((1, L), jnp.float32)] * 3,
        ),
        compiler_params=pltpu.CompilerParams(
            dimension_semantics=("parallel", "parallel", "arbitrary"),
            vmem_limit_bytes=_VMEM_LIMIT_BYTES,
        ),
        cost_estimate=cost,
    )(p3, g3)


@functools.partial(jax.jit, static_argnames=("epsilon",))
def iou_loss(pred_probs, target_mask, epsilon=1e-6):
    """Pallas-backed equivalent of IoULoss.forward (pred_probs are probabilities)."""
    assert pred_probs.shape == target_mask.shape, (
        f"Input and target shapes must match. Got {pred_probs.shape} and "
        f"{target_mask.shape}")

    # Keep floats in their original dtype (bf16 stays bf16 -> half the HBM
    # bytes); cast bool/int masks to bf16 to avoid packed-layout lowering issues.
    def _as_float(x):
        return x if jnp.issubdtype(x.dtype, jnp.floating) else x.astype(jnp.bfloat16)

    p = _as_float(pred_probs)
    g = _as_float(target_mask)

    B = p.shape[0]
    F = 1
    for d in p.shape[1:]:
        F *= d
    if F == 0:  # degenerate empty reduction -> iou = eps/eps = 1 -> loss 0
        return jnp.float32(0.0)

    itemsize = max(p.dtype.itemsize, g.dtype.itemsize)
    W = p.shape[-1] if p.ndim >= 2 else 1

    if p.ndim >= 2 and W % _LANE == 0 and 8 * W * itemsize <= _BLOCK_BYTE_BUDGET:
        # Lane-friendly trailing dim: keep the original lane axis; collapsing
        # only the middle dims avoids any lane re-tiling / padding pass.
        L = W
        M = F // W
        p3 = jnp.reshape(p, (B, M, L))
        g3 = jnp.reshape(g, (B, M, L))
    else:
        # Lane-sparse (or oversized) trailing dim: flatten to a lane-dense
        # (B, R, 128) view; pad the feature axis only if F % 128 != 0
        # (zero padding contributes exactly 0 to all three sums).
        L = _LANE
        Fp = -(-F // L) * L
        p2 = jnp.reshape(p, (B, F))
        g2 = jnp.reshape(g, (B, F))
        if Fp != F:
            p2 = jnp.pad(p2, ((0, 0), (0, Fp - F)))
            g2 = jnp.pad(g2, ((0, 0), (0, Fp - F)))
        M = Fp // L
        p3 = jnp.reshape(p2, (B, M, L))
        g3 = jnp.reshape(g2, (B, M, L))

    tm, n_mblocks = _choose_row_tile(M, L, itemsize)
    # Explicit megacore split axis (independent of B) when chunks split evenly.
    nsplit = 2 if (n_mblocks >= 2 and n_mblocks % 2 == 0) else 1
    k_chunks = n_mblocks // nsplit
    need_mask = (n_mblocks * tm != M)

    stats = _per_batch_stats(p3, g3, tm=tm, nsplit=nsplit, k_chunks=k_chunks,
                             m_rows=M, need_mask=need_mask)   # (B, nsplit, 3, L)

    inter = jnp.sum(stats[:, :, 0, :], axis=(1, 2))           # (B,)
    sum_p = jnp.sum(stats[:, :, 1, :], axis=(1, 2))           # (B,)
    sum_g = jnp.sum(stats[:, :, 2, :], axis=(1, 2))           # (B,)

    union = sum_p + sum_g - inter
    iou = (inter + epsilon) / (union + epsilon)
    return 1.0 - jnp.mean(iou)


def _reference_iou_loss(pred_probs, target_mask, epsilon=1e-6):
    """Pure-JAX reference mirroring the PyTorch module, for verification."""
    p = pred_probs.astype(jnp.float32)
    g = target_mask.astype(jnp.float32)
    dims = tuple(range(1, p.ndim))
    inter = jnp.sum(p * g, axis=dims)
    union = jnp.sum(p, axis=dims) + jnp.sum(g, axis=dims) - inter
    iou = (inter + epsilon) / (union + epsilon)
    return 1.0 - jnp.mean(iou)


if __name__ == "__main__":
    key = jax.random.PRNGKey(0)
    k_p, k_t, k_p2, k_t2 = jax.random.split(key, 4)

    # Test 1: canonical small shape (lane-sparse trailing dim -> flatten path).
    B, C, H, W = 2, 4, 16, 16
    pred_probs = jax.nn.sigmoid(
        jax.random.normal(k_p, (B, C, H, W), dtype=jnp.float32) * 2.0)
    target_mask = (jax.random.uniform(k_t, (B, C, H, W)) > 0.5).astype(jnp.float32)
    loss = jax.block_until_ready(iou_loss(pred_probs, target_mask))
    ref = jax.block_until_ready(_reference_iou_loss(pred_probs, target_mask))
    assert jnp.allclose(loss, ref, rtol=1e-5, atol=1e-6), (loss, ref)

    # Test 2: lane-friendly trailing dim (direct (B, M, W) path, 2-way chunk
    # split) with a boolean mask (exercises the bf16 cast).
    B2, C2, H2, W2 = 2, 3, 16, 128
    pred2 = jax.nn.sigmoid(jax.random.normal(k_p2, (B2, C2, H2, W2), jnp.float32))
    targ2 = jax.random.uniform(k_t2, (B2, C2, H2, W2)) > 0.5
    loss2 = jax.block_until_ready(iou_loss(pred2, targ2))
    ref2 = jax.block_until_ready(_reference_iou_loss(pred2, targ2))
    assert jnp.allclose(loss2, ref2, rtol=1e-5, atol=1e-6), (loss2, ref2)

    print("KERNEL_OK")
</pallas_src>

<mosaic_0001>
module attributes {stable_mosaic.version = 11 : i64} {
  func.func @_iou_stats_kernel(%arg0: i32, %arg1: i32, %arg2: i32, %arg3: memref<1x8x128xf32, #tpu.memory_space<vmem>>, %arg4: memref<1x8x128xf32, #tpu.memory_space<vmem>>, %arg5: memref<1x1x3x128xf32, #tpu.memory_space<vmem>>, %arg6: memref<1x128xf32, #tpu.memory_space<vmem>>, %arg7: memref<1x128xf32, #tpu.memory_space<vmem>>, %arg8: memref<1x128xf32, #tpu.memory_space<vmem>>) attributes {dimension_semantics = [#tpu.dimension_semantics<parallel>, #tpu.dimension_semantics<parallel>, #tpu.dimension_semantics<arbitrary>], iteration_bounds = array<i64: 2, 1, 1>, scalar_prefetch = 0 : i64, scratch_operands = 3 : i64, tpu.core_type = #tpu.core_type<tc>, window_params = [{transform_indices = @transform_0, window_bounds = array<i64: 1, 8, 128>}, {transform_indices = @transform_1, window_bounds = array<i64: 1, 8, 128>}, {transform_indices = @transform_2, window_bounds = array<i64: 1, 1, 3, 128>}]} {
    %c0 = arith.constant 0 : index
    %c0_0 = arith.constant 0 : index
    %c0_1 = arith.constant 0 : index
    %0 = vector.load %arg3[%c0, %c0_0, %c0_1] : memref<1x8x128xf32, #tpu.memory_space<vmem>>, vector<1x8x128xf32>
    %1 = vector.shape_cast %0 : vector<1x8x128xf32> to vector<8x128xf32>
    %c0_2 = arith.constant 0 : index
    %c0_3 = arith.constant 0 : index
    %c0_4 = arith.constant 0 : index
    %2 = vector.load %arg4[%c0_2, %c0_3, %c0_4] : memref<1x8x128xf32, #tpu.memory_space<vmem>>, vector<1x8x128xf32>
    %3 = vector.shape_cast %2 : vector<1x8x128xf32> to vector<8x128xf32>
    %4 = arith.mulf %1, %3 : vector<8x128xf32>
    %cst = arith.constant dense<0.000000e+00> : vector<128xf32>
    %5 = vector.multi_reduction <add>, %4, %cst [0] : vector<8x128xf32> to vector<128xf32>
    %6 = vector.shape_cast %5 : vector<128xf32> to vector<1x128xf32>
    %cst_5 = arith.constant dense<0.000000e+00> : vector<128xf32>
    %7 = vector.multi_reduction <add>, %1, %cst_5 [0] : vector<8x128xf32> to vector<128xf32>
    %8 = vector.shape_cast %7 : vector<128xf32> to vector<1x128xf32>
    %cst_6 = arith.constant dense<0.000000e+00> : vector<128xf32>
    %9 = vector.multi_reduction <add>, %3, %cst_6 [0] : vector<8x128xf32> to vector<128xf32>
    %10 = vector.shape_cast %9 : vector<128xf32> to vector<1x128xf32>
    %c0_i32 = arith.constant 0 : i32
    %11 = arith.cmpi eq, %arg2, %c0_i32 : i32
    %12 = arith.extui %11 : i1 to i32
    %c0_i32_7 = arith.constant 0 : i32
    %13 = arith.cmpi ne, %12, %c0_i32_7 : i32
    scf.if %13 {
      %c0_12 = arith.constant 0 : index
      %c0_13 = arith.constant 0 : index
      %20 = vector.load %arg6[%c0_12, %c0_13] : memref<1x128xf32, #tpu.memory_space<vmem>>, vector<1x128xf32>
      tpu.vector_store %arg6[%c0_12, %c0_13], %6 {strides = array<i32>} : memref<1x128xf32, #tpu.memory_space<vmem>>, vector<1x128xf32>,
      %c0_14 = arith.constant 0 : index
      %c0_15 = arith.constant 0 : index
      %21 = vector.load %arg7[%c0_14, %c0_15] : memref<1x128xf32, #tpu.memory_space<vmem>>, vector<1x128xf32>
      tpu.vector_store %arg7[%c0_14, %c0_15], %8 {strides = array<i32>} : memref<1x128xf32, #tpu.memory_space<vmem>>, vector<1x128xf32>,
      %c0_16 = arith.constant 0 : index
      %c0_17 = arith.constant 0 : index
      %22 = vector.load %arg8[%c0_16, %c0_17] : memref<1x128xf32, #tpu.memory_space<vmem>>, vector<1x128xf32>
      tpu.vector_store %arg8[%c0_16, %c0_17], %10 {strides = array<i32>} : memref<1x128xf32, #tpu.memory_space<vmem>>, vector<1x128xf32>,
    } else {
    }
    %c0_i32_8 = arith.constant 0 : i32
    %14 = arith.cmpi sgt, %arg2, %c0_i32_8 : i32
    %15 = arith.extui %14 : i1 to i32
    %c0_i32_9 = arith.constant 0 : i32
    %16 = arith.cmpi ne, %15, %c0_i32_9 : i32
    scf.if %16 {
      %c0_12 = arith.constant 0 : index
      %c0_13 = arith.constant 0 : index
      %20 = vector.load %arg6[%c0_12, %c0_13] : memref<1x128xf32, #tpu.memory_space<vmem>>, vector<1x128xf32>
      %21 = arith.addf %20, %6 : vector<1x128xf32>
      %c0_14 = arith.constant 0 : index
      %c0_15 = arith.constant 0 : index
      %22 = vector.load %arg6[%c0_14, %c0_15] : memref<1x128xf32, #tpu.memory_space<vmem>>, vector<1x128xf32>
      tpu.vector_store %arg6[%c0_14, %c0_15], %21 {strides = array<i32>} : memref<1x128xf32, #tpu.memory_space<vmem>>, vector<1x128xf32>,
      %c0_16 = arith.constant 0 : index
      %c0_17 = arith.constant 0 : index
      %23 = vector.load %arg7[%c0_16, %c0_17] : memref<1x128xf32, #tpu.memory_space<vmem>>, vector<1x128xf32>
      %24 = arith.addf %23, %8 : vector<1x128xf32>
      %c0_18 = arith.constant 0 : index
      %c0_19 = arith.constant 0 : index
      %25 = vector.load %arg7[%c0_18, %c0_19] : memref<1x128xf32, #tpu.memory_space<vmem>>, vector<1x128xf32>
      tpu.vector_store %arg7[%c0_18, %c0_19], %24 {strides = array<i32>} : memref<1x128xf32, #tpu.memory_space<vmem>>, vector<1x128xf32>,
      %c0_20 = arith.constant 0 : index
      %c0_21 = arith.constant 0 : index
      %26 = vector.load %arg8[%c0_20, %c0_21] : memref<1x128xf32, #tpu.memory_space<vmem>>, vector<1x128xf32>
      %27 = arith.addf %26, %10 : vector<1x128xf32>
      %c0_22 = arith.constant 0 : index
      %c0_23 = arith.constant 0 : index
      %28 = vector.load %arg8[%c0_22, %c0_23] : memref<1x128xf32, #tpu.memory_space<vmem>>, vector<1x128xf32>
      tpu.vector_store %arg8[%c0_22, %c0_23], %27 {strides = array<i32>} : memref<1x128xf32, #tpu.memory_space<vmem>>, vector<1x128xf32>,
    } else {
    }
    %c0_i32_10 = arith.constant 0 : i32
    %17 = arith.cmpi eq, %arg2, %c0_i32_10 : i32
    %18 = arith.extui %17 : i1 to i32
    %c0_i32_11 = arith.constant 0 : i32
    %19 = arith.cmpi ne, %18, %c0_i32_11 : i32
    scf.if %19 {
      %c0_12 = arith.constant 0 : index
      %c0_13 = arith.constant 0 : index
      %20 = vector.load %arg6[%c0_12, %c0_13] : memref<1x128xf32, #tpu.memory_space<vmem>>, vector<1x128xf32>
      %c0_14 = arith.constant 0 : index
      %c0_15 = arith.constant 0 : index
      %21 = vector.load %arg7[%c0_14, %c0_15] : memref<1x128xf32, #tpu.memory_space<vmem>>, vector<1x128xf32>
      %c0_16 = arith.constant 0 : index
      %c0_17 = arith.constant 0 : index
      %22 = vector.load %arg8[%c0_16, %c0_17] : memref<1x128xf32, #tpu.memory_space<vmem>>, vector<1x128xf32>
      %23 = tpu.concatenate %20, %21, %22 in 0 : vector<1x128xf32>, vector<1x128xf32>, vector<1x128xf32> -> vector<3x128xf32>
      %24 = vector.shape_cast %23 : vector<3x128xf32> to vector<1x1x3x128xf32>
      %c0_18 = arith.constant 0 : index
      %c0_19 = arith.constant 0 : index
      %c0_20 = arith.constant 0 : index
      %c0_21 = arith.constant 0 : index
      %25 = vector.load %arg5[%c0_18, %c0_19, %c0_20, %c0_21] : memref<1x1x3x128xf32, #tpu.memory_space<vmem>>, vector<1x1x3x128xf32>
      tpu.vector_store %arg5[%c0_18, %c0_19, %c0_20, %c0_21], %24 {strides = array<i32>} : memref<1x1x3x128xf32, #tpu.memory_space<vmem>>, vector<1x1x3x128xf32>,
    } else {
    }
    return
  }
  func.func @transform_0(%arg0: i32, %arg1: i32, %arg2: i32) -> (i32, i32, i32) {
    %c1_i32 = arith.constant 1 : i32
    %0 = arith.muli %arg1, %c1_i32 : i32
    %1 = arith.addi %0, %arg2 : i32
    %c0_i32 = arith.constant 0 : i32
    %c0_i32_0 = arith.constant 0 : i32
    return %arg0, %1, %c0_i32 : i32, i32, i32
  }
  func.func @transform_1(%arg0: i32, %arg1: i32, %arg2: i32) -> (i32, i32, i32) {
    %c1_i32 = arith.constant 1 : i32
    %0 = arith.muli %arg1, %c1_i32 : i32
    %1 = arith.addi %0, %arg2 : i32
    %c0_i32 = arith.constant 0 : i32
    %c0_i32_0 = arith.constant 0 : i32
    return %arg0, %1, %c0_i32 : i32, i32, i32
  }
  func.func @transform_2(%arg0: i32, %arg1: i32, %arg2: i32) -> (i32, i32, i32, i32) {
    %c0_i32 = arith.constant 0 : i32
    %c0_i32_0 = arith.constant 0 : i32
    %c0_i32_1 = arith.constant 0 : i32
    return %arg0, %arg1, %c0_i32, %c0_i32_0 : i32, i32, i32, i32
  }
}

</mosaic_0001>

<llo_original>
// kernel: iou_loss.1
$region0: #{iou_loss.1}
  #allocation0 [shape = 'u32[]', space=smem, size = 0x4, offset = 0x4, fixed_abs, tag = 'smem constant byte address 0x4 - core index']
  #allocation1 [shape = 'u32[144,128]{1,0:T(1,128)}', space=vmem, size = 0x12000, scoped, tag = 'internal scratch']
  #allocation2 [shape = 'f32[1,128]{1,0:T(1,128)}', space=vmem, size = 0x200, scoped, tag = 'scratch operand']
  #allocation3 [shape = 'f32[1,128]{1,0:T(1,128)}', space=vmem, size = 0x200, scoped, tag = 'scratch operand']
  #allocation4 [shape = 'f32[1,128]{1,0:T(1,128)}', space=vmem, size = 0x200, scoped, tag = 'scratch operand']
  %s0 = inlined_call_operand.vmem [shape: f32[2,8,128], index: 0, kind: input, shape index: {}]
  %s1 = inlined_call_operand.vmem [shape: f32[2,8,128], index: 1, kind: input, shape index: {}]
  %s2 = inlined_call_operand.vmem [shape: f32[2,1,3,128], index: 2, kind: output, shape index: {}]
  %s3 = sld [smem:[#allocation0]]
  $region53: #{iou_loss.1} parent=0
    _
  %s5 = ssub.s32 1, %s3
  %s6 = scalar_select 0, %s5, %s3
  loop: start=0, step=1, limit=4
  $region2: #{iou_loss.1} parent=0 // loop_pre_header
    _
  $region3: #{iou_loss.1} parent=0 // loop_header
    %s8 = sphi 0, %s12
    %p9 = scmp.ge.s32.totalorder %s8, 4
    %s15 = sphi 0, %s34
    %s16 = sphi 0, %s30
    %s17 = sphi 0, %s26
    %s18 = sphi 0, %s15
    %s19 = sphi 0, %s16
    %s20 = sphi 0, %s17
    %s21 = sphi 0, %s18
    %s22 = sphi 0, %s19
    %s23 = sphi 0, %s20
    %s41 = sphi 0, %s43
    %s44 = sphi 0, %s41
    %s45 = sphi 0, %s44
    %s61 = sphi 0, %s45
    %s71 = sphi 0, %s73
    %s74 = sphi 0, %s71
    %s75 = sphi 0, %s74
    %s91 = sphi 0, %s75
    %s99 = sphi 0, %s101
    %s102 = sphi 0, %s99
    %s103 = sphi 0, %s102
    %s119 = sphi 0, %s103
  $region4: #{iou_loss.1} parent=0 // loop_header_branch
    %11 = sbr.rel (%p9) target = $region8
  $region5: #{iou_loss.1} parent=0 // loop_body
    %s13 = ssub.s32 %s8, 1
    %s14 = ssub.s32 %s8, 2
    %s24 = sadd.s32 1, %s17
    %p25 = scmp.ge.s32.totalorder %s24, 1
    %s26 = scalar_select %p25, 0, %s24
    %s27 = sadd.s32 1, %s16
    %s28 = scalar_select %p25, %s27, %s16
    %p29 = scmp.ge.s32.totalorder %s28, 1
    %s30 = scalar_select %p29, 0, %s28
    %s31 = sadd.s32 1, %s15
    %s32 = scalar_select %p29, %s31, %s15
    %p33 = scmp.ge.s32.totalorder %s32, 2
    %s34 = scalar_select %p33, 0, %s32
    %s35 = sadd.s32 %s16, %s17
    %s36 = sadd.s32 %s30, %s26
    %s37 = ssub.s32 %s15, %s34
    %s38 = ssub.s32 %s35, %s36
    %s39 = sor.u32 %s37, %s38
    %p40 = scmp.eq.s32.totalorder %s39, 0
    %s42 = sadd.s32 %s41, 1
    %s43 = scalar_select %p40, %s41, %s42
    %p46 = pneg %p40
    %p47 = scmp.eq.s32.totalorder %s8, 1
    %p48 = por %p46, %p47
    %p49 = scmp.ne.s32.totalorder %s41, %s44
    %p50 = scmp.eq.s32.totalorder %s8, 0
    %p51 = por %p49, %p50
    %p52 = scmp.ne.s32.totalorder %s41, %s44
    %p53 = scmp.eq.s32.totalorder %s13, 1
    %p54 = por %p52, %p53
    %p55 = scmp.ne.s32.totalorder %s44, %s45
    %p56 = scmp.eq.s32.totalorder %s13, 0
    %p57 = por %p55, %p56
    %p58 = scmp.ne.s32.totalorder %s44, %s45
    %p59 = scmp.eq.s32.totalorder %s14, 1
    %p60 = por %p58, %p59
    %p62 = scmp.ne.s32.totalorder %s45, %s61
    %p63 = scmp.eq.s32.totalorder %s14, 0
    %p64 = por %p62, %p63
    %s65 = sadd.s32 %s16, %s17
    %s66 = sadd.s32 %s30, %s26
    %s67 = ssub.s32 %s15, %s34
    %s68 = ssub.s32 %s65, %s66
    %s69 = sor.u32 %s67, %s68
    %p70 = scmp.eq.s32.totalorder %s69, 0
    %s72 = sadd.s32 %s71, 1
    %s73 = scalar_select %p70, %s71, %s72
    %p76 = pneg %p70
    %p77 = scmp.eq.s32.totalorder %s8, 1
    %p78 = por %p76, %p77
    %p79 = scmp.ne.s32.totalorder %s71, %s74
    %p80 = scmp.eq.s32.totalorder %s8, 0
    %p81 = por %p79, %p80
    %p82 = scmp.ne.s32.totalorder %s71, %s74
    %p83 = scmp.eq.s32.totalorder %s13, 1
    %p84 = por %p82, %p83
    %p85 = scmp.ne.s32.totalorder %s74, %s75
    %p86 = scmp.eq.s32.totalorder %s13, 0
    %p87 = por %p85, %p86
    %p88 = scmp.ne.s32.totalorder %s74, %s75
    %p89 = scmp.eq.s32.totalorder %s14, 1
    %p90 = por %p88, %p89
    %p92 = scmp.ne.s32.totalorder %s75, %s91
    %p93 = scmp.eq.s32.totalorder %s14, 0
    %p94 = por %p92, %p93
    %s95 = ssub.s32 %s15, %s34
    %s96 = ssub.s32 %s16, %s30
    %s97 = sor.u32 %s95, %s96
    %p98 = scmp.eq.s32.totalorder %s97, 0
    %s100 = sadd.s32 %s99, 1
    %s101 = scalar_select %p98, %s99, %s100
    %p104 = pneg %p98
    %p105 = scmp.eq.s32.totalorder %s8, 1
    %p106 = por %p104, %p105
    %p107 = scmp.ne.s32.totalorder %s99, %s102
    %p108 = scmp.eq.s32.totalorder %s8, 0
    %p109 = por %p107, %p108
    %p110 = scmp.ne.s32.totalorder %s99, %s102
    %p111 = scmp.eq.s32.totalorder %s13, 1
    %p112 = por %p110, %p111
    %p113 = scmp.ne.s32.totalorder %s102, %s103
    %p114 = scmp.eq.s32.totalorder %s13, 0
    %p115 = por %p113, %p114
    %p116 = scmp.ne.s32.totalorder %s102, %s103
    %p117 = scmp.eq.s32.totalorder %s14, 1
    %p118 = por %p116, %p117
    %p120 = scmp.ne.s32.totalorder %s103, %s119
    %p121 = scmp.eq.s32.totalorder %s14, 0
    %p122 = por %p120, %p121
    %p123 = scmp.le.s32.totalorder 1, %s8
    %p124 = scmp.lt.s32.totalorder %s8, 3
    %p125 = pnand %p123, %p124
    %p126 = pneg %p125
    // Predicated region
    $region9: #{iou_loss.1} parent=5 // pred_check
      _
    $region10: #{iou_loss.1} parent=5 // pred_check_branch
      %128 = sbr.rel (%p125) target = $region12
    $region11: #{iou_loss.1} parent=5 // pred_region
      %s129 = ssub.s32 %s8, 1
    $region12: #{iou_loss.1} parent=5 // pred_fallthru
      _
    %p130 = scmp.lt.s32.totalorder %s8, 2
    // Predicated region
    $region13: #{iou_loss.1} parent=5 // pred_check
      %p131 = pneg %p130
    $region14: #{iou_loss.1} parent=5 // pred_check_branch
      %133 = sbr.rel (%p131) target = $region16
    $region15: #{iou_loss.1} parent=5 // pred_region
      // Predicated region
      $region17: #{iou_loss.1} parent=15 // pred_check
        %p134 = pneg %p51
      $region18: #{iou_loss.1} parent=15 // pred_check_branch
        %136 = sbr.rel (%p134) target = $region20
      $region19: #{iou_loss.1} parent=15 // pred_region
        %s137 = sadd.s32 %s16, %s17
        %p138 = scmp.lt.s32.totalorder %s15, 1
        %s139 = scalar_select %p138, %s15, 1
        %p140 = scmp.lt.s32.totalorder %s137, 0
        %s141 = scalar_select %p140, %s137, 0
        %s142 = sadd.s32 %s141, %s139
        %s143 = smul.addr %s142, 8
        %s144 = scalar_lea.vmem %s0, %s143
        %s145 = sadd.s32 %s16, %s17
      $region20: #{iou_loss.1} parent=15 // pred_fallthru
        _
      // Predicated region
      $region21: #{iou_loss.1} parent=15 // pred_check
        %p146 = pneg %p81
      $region22: #{iou_loss.1} parent=15 // pred_check_branch
        %148 = sbr.rel (%p146) target = $region24
      $region23: #{iou_loss.1} parent=15 // pred_region
        %s149 = sadd.s32 %s16, %s17
        %p150 = scmp.lt.s32.totalorder %s15, 1
        %s151 = scalar_select %p150, %s15, 1
        %p152 = scmp.lt.s32.totalorder %s149, 0
        %s153 = scalar_select %p152, %s149, 0
        %s154 = sadd.s32 %s153, %s151
        %s155 = smul.addr %s154, 8
        %s156 = scalar_lea.vmem %s1, %s155
        %s157 = sadd.s32 %s16, %s17
      $region24: #{iou_loss.1} parent=15 // pred_fallthru
        _
    $region16: #{iou_loss.1} parent=5 // pred_fallthru
      _
    %p158 = scmp.le.s32.totalorder 1, %s8
    %p159 = scmp.lt.s32.totalorder %s8, 3
    %p160 = pnand %p158, %p159
    %p161 = pneg %p160
    // Predicated region
    $region25: #{iou_loss.1} parent=5 // pred_check
      _
    $region26: #{iou_loss.1} parent=5 // pred_check_branch
      %163 = sbr.rel (%p160) target = $region28
    $region27: #{iou_loss.1} parent=5 // pred_region
      %s164 = ssub.s32 %s8, 1
      %s165 = sadd.s32 %s19, %s20
      %p166 = scmp.lt.s32.totalorder %s18, 1
      %s167 = scalar_select %p166, %s18, 1
      %p168 = scmp.lt.s32.totalorder %s165, 0
      %s169 = scalar_select %p168, %s165, 0
      %s170 = sadd.s32 %s169, %s167
      %s171 = smul.addr %s170, 8
      %s172 = scalar_lea.vmem %s0, %s171
      %p173 = pneg %p57
      %p174 = pneg %p54
      %s175 = sadd.s32 %s19, %s20
      %p176 = scmp.lt.s32.totalorder %s18, 1
      %s177 = scalar_select %p176, %s18, 1
      %p178 = scmp.lt.s32.totalorder %s175, 0
      %s179 = scalar_select %p178, %s175, 0
      %s180 = sadd.s32 %s179, %s177
      %s181 = smul.addr %s180, 8
      %s182 = scalar_lea.vmem %s1, %s181
      %p183 = pneg %p87
      %p184 = pneg %p84
      %p185 = pneg %p115
      %p186 = pneg %p112
      %p187 = scmp.lt.s32.totalorder %s18, 1
      %s188 = scalar_select %p187, %s18, 1
      %p189 = scmp.lt.s32.totalorder %s19, 0
      %s190 = scalar_select %p189, %s19, 0
      %s191 = sadd.s32 %s190, %s188
      %s192 = smul.addr %s191, 4
      %s193 = scalar_lea.vmem %s2, %s192
      %s194 = sadd.s32 %s19, %s20
      %p195 = scmp.lt.s32.totalorder %s18, 1
      %s196 = scalar_select %p195, %s18, 1
      %p197 = scmp.lt.s32.totalorder %s194, 0
      %s198 = scalar_select %p197, %s194, 0
      %s199 = sadd.s32 %s198, %s196
      %s200 = smul.addr %s199, 8
      %s201 = scalar_lea.vmem %s0, %s200
      %s202 = sadd.s32 %s19, %s20
      %s203 = sadd.s32 %s19, %s20
      %p204 = scmp.lt.s32.totalorder %s18, 1
      %s205 = scalar_select %p204, %s18, 1
      %p206 = scmp.lt.s32.totalorder %s203, 0
      %s207 = scalar_select %p206, %s203, 0
      %s208 = sadd.s32 %s207, %s205
      %s209 = smul.addr %s208, 8
      %s210 = scalar_lea.vmem %s1, %s209
      %s211 = sadd.s32 %s19, %s20
      %p212 = scmp.lt.s32.totalorder %s18, 1
      %s213 = scalar_select %p212, %s18, 1
      %p214 = scmp.lt.s32.totalorder %s19, 0
      %s215 = scalar_select %p214, %s19, 0
      %s216 = sadd.s32 %s215, %s213
      %s217 = smul.addr %s216, 4
      %s218 = scalar_lea.vmem %s2, %s217
      %v219 = vld [vmem:[%s201] sm:$0xff]
      %v220 = vld [vmem:[%s210] sm:$0xff]
      %v221 = vmul.f32 %v219, %v220
      %v222 = vrot.slane %v221, 4
      %v223 = vadd.f32 %v221, %v222
      %v224 = vrot.slane %v223, 2
      %v225 = vadd.f32 %v223, %v224
      %v226 = vrot.slane %v225, 1
      %v227 = vadd.f32 %v225, %v226
      %v228 = vrot.slane %v219, 4
      %v229 = vadd.f32 %v219, %v228
      %v230 = vrot.slane %v229, 2
      %v231 = vadd.f32 %v229, %v230
      %v232 = vrot.slane %v231, 1
      %v233 = vadd.f32 %v231, %v232
      %v234 = vrot.slane %v220, 4
      %v235 = vadd.f32 %v220, %v234
      %v236 = vrot.slane %v235, 2
      %v237 = vadd.f32 %v235, %v236
      %v238 = vrot.slane %v237, 1
      %v239 = vadd.f32 %v237, %v238
      %p240 = scmp.eq.s32.totalorder %s20, 0
      // Predicated region
      $region29: #{iou_loss.1} parent=27 // pred_check
        %p241 = pneg %p240
      $region30: #{iou_loss.1} parent=27 // pred_check_branch
        %243 = sbr.rel (%p241) target = $region32
      $region31: #{iou_loss.1} parent=27 // pred_region
        %244 = vst [vmem:[#allocation2] sm:$0x1] %v227
        %245 = vst [vmem:[#allocation3] sm:$0x1] %v233
        %246 = vst [vmem:[#allocation4] sm:$0x1] %v239
      $region32: #{iou_loss.1} parent=27 // pred_fallthru
        _
      %p247 = scmp.gt.s32.totalorder %s20, 0
      // Predicated region
      $region33: #{iou_loss.1} parent=27 // pred_check
        %p248 = pneg %p247
      $region34: #{iou_loss.1} parent=27 // pred_check_branch
        %250 = sbr.rel (%p248) target = $region36
      $region35: #{iou_loss.1} parent=27 // pred_region
        %v251 = vld [vmem:[#allocation2] sm:$0x1]
        %v252 = vadd.f32 %v251, %v227
        %253 = vst [vmem:[#allocation2] sm:$0x1] %v252
        %v254 = vld [vmem:[#allocation3] sm:$0x1]
        %v255 = vadd.f32 %v254, %v233
        %256 = vst [vmem:[#allocation3] sm:$0x1] %v255
        %v257 = vld [vmem:[#allocation4] sm:$0x1]
        %v258 = vadd.f32 %v257, %v239
        %259 = vst [vmem:[#allocation4] sm:$0x1] %v258
      $region36: #{iou_loss.1} parent=27 // pred_fallthru
        _
      // Predicated region
      $region37: #{iou_loss.1} parent=27 // pred_check
        %p260 = pneg %p240
      $region38: #{iou_loss.1} parent=27 // pred_check_branch
        %262 = sbr.rel (%p260) target = $region40
      $region39: #{iou_loss.1} parent=27 // pred_region
        %v263 = vld [vmem:[#allocation2] sm:$0x1]
        %v264 = vld [vmem:[#allocation3] sm:$0x1]
        %v265 = vld [vmem:[#allocation4] sm:$0x1]
        %v267 = vlaneseq
        %v268 = vshrl.u32 %v267, 7
        %v269 = vsub.s32 0, %v268
        %v270 = vrot.slane %v264, %v269
        %v273 = vlaneseq
        %v274 = vshrl.u32 %v273, 7
        %v275 = vsub.s32 0, %v274
        %v276 = vrot.slane %v265, %v275
        %vm278 = vcmask 1040384
        %v279 = vsel %vm278, %v263, %v270
        %vm280 = vcmask 1041408
        %v281 = vsel %vm280, %v279, %v276
        %282 = vst [vmem:[%s218] sm:$0x7] %v281
      $region40: #{iou_loss.1} parent=27 // pred_fallthru
        _
      %p283 = scmp.lt.s32.totalorder %s18, 1
      %s284 = scalar_select %p283, %s18, 1
      %p285 = scmp.lt.s32.totalorder %s19, 0
      %s286 = scalar_select %p285, %s19, 0
      %s287 = sadd.s32 %s286, %s284
      %s288 = smul.addr %s287, 4
      %s289 = scalar_lea.vmem %s2, %s288
      // Predicated region
      $region41: #{iou_loss.1} parent=27 // pred_check
        %p290 = pneg %p112
      $region42: #{iou_loss.1} parent=27 // pred_check_branch
        %292 = sbr.rel (%p290) target = $region44
      $region43: #{iou_loss.1} parent=27 // pred_region
        _
      $region44: #{iou_loss.1} parent=27 // pred_fallthru
        _
    $region28: #{iou_loss.1} parent=5 // pred_fallthru
      _
    %p293 = scmp.le.s32.totalorder 2, %s8
    // Predicated region
    $region45: #{iou_loss.1} parent=5 // pred_check
      %p294 = pneg %p293
    $region46: #{iou_loss.1} parent=5 // pred_check_branch
      %296 = sbr.rel (%p294) target = $region48
    $region47: #{iou_loss.1} parent=5 // pred_region
      %s297 = ssub.s32 %s8, 2
      // Predicated region
      $region49: #{iou_loss.1} parent=47 // pred_check
        %p298 = pneg %p118
      $region50: #{iou_loss.1} parent=47 // pred_check_branch
        %300 = sbr.rel (%p298) target = $region52
      $region51: #{iou_loss.1} parent=47 // pred_region
        %p301 = scmp.lt.s32.totalorder %s21, 1
        %s302 = scalar_select %p301, %s21, 1
        %p303 = scmp.lt.s32.totalorder %s22, 0
        %s304 = scalar_select %p303, %s22, 0
        %s305 = sadd.s32 %s304, %s302
        %s306 = smul.addr %s305, 4
        %s307 = scalar_lea.vmem %s2, %s306
      $region52: #{iou_loss.1} parent=47 // pred_fallthru
        _
    $region48: #{iou_loss.1} parent=5 // pred_fallthru
      _
  $region6: #{iou_loss.1} parent=0 // loop_footer
    %s12 = sadd.s32 1, %s8
  $region7: #{iou_loss.1} parent=0 // loop_footer_branch
    %7 = sbr.rel target = $region3
  $region8: #{iou_loss.1} parent=0 // loop_exit
    _

</llo_original>
